<compile_context>
chip_gen: v5e
topology: v5e:2x2
jax: 0.10.0
libtpu: 0.0.40
codegen_flags: <defaults>
</compile_context>

<pallas_src>
import functools

import jax
import jax.numpy as jnp
from jax.experimental import pallas as pl
from jax.experimental.pallas import tpu as pltpu

INPUT_DIM = 3
HIDDEN_DIM = 256
OUT_DIM = 4


def coarse_mlp_kernel(xt_ref, w1t_ref, b1_ref, w2t_ref, b2_ref, o_ref, *,
                      matmul_dtype):
    # xt_ref : (3, TN)   points, feature-major (lane-dense over points)
    # w1t_ref: (H, 3)    layer-1 weight, hidden-major
    # b1_ref : (H, 1)
    # w2t_ref: (4, H)    layer-2 weight, output-major
    # b2_ref : (4, 1)
    # o_ref  : (4, TN)   lane-dense output slab
    xt = xt_ref[...].astype(matmul_dtype)          # (3, TN)
    w1t = w1t_ref[...].astype(matmul_dtype)        # (H, 3)

    # ---- Layer 1 on the MXU: h^T = W1^T @ x^T, f32 accumulation.
    h = jnp.dot(w1t, xt, preferred_element_type=jnp.float32)   # (H, TN) f32
    h = h + b1_ref[...]                                         # bias (VPU)
    # ReLU + cast in one pass: the only (H, TN) slab layer 2 reads is already
    # in matmul_dtype (halves hidden-slab VMEM/vst traffic in the bf16 path).
    h = jnp.maximum(h, 0.0).astype(matmul_dtype)                # (H, TN)

    # ---- Layer 2 on the MXU, transposed: y^T = W2^T @ h^T.  The "4" outputs
    # are streamed LHS rows; the big point dim TN stays lane-dense.
    y = jnp.dot(w2t_ref[...].astype(matmul_dtype), h,
                preferred_element_type=jnp.float32)             # (4, TN) f32
    o_ref[...] = (y + b2_ref[...]).astype(o_ref.dtype)


def _vmem_capacity_bytes():
    """Per-core VMEM capacity; conservative fallback when not on real TPU."""
    try:
        return int(pltpu.get_tpu_info().vmem_capacity_bytes)
    except Exception:
        return 64 * 1024 * 1024  # v7x per-TC minimum; safe everywhere


def _tile_vmem_bytes(tile, matmul_itemsize):
    """Honest per-grid-step VMEM footprint for the chosen tile."""
    in_tiles = 2 * INPUT_DIM * tile * 4          # double-buffered x^T tile
    out_tiles = 2 * OUT_DIM * tile * 4           # double-buffered y^T tile
    hidden_f32 = HIDDEN_DIM * tile * 4           # f32 dot accumulation slab
    hidden_mm = HIDDEN_DIM * tile * matmul_itemsize  # post-ReLU operand slab
    weights = 2 * 4 * (HIDDEN_DIM * INPUT_DIM + HIDDEN_DIM
                       + OUT_DIM * HIDDEN_DIM + OUT_DIM)
    scratch = 1 << 20                            # Mosaic internal scratch
    return in_tiles + out_tiles + hidden_f32 + hidden_mm + weights + scratch


@functools.partial(jax.jit, static_argnames=("tile_n", "use_bf16"))
def coarse_network_forward(x, w1, b1, w2, b2, *, tile_n=8192, use_bf16=False):
    """x: [N, 3] -> [N, 4]  (same semantics as the PyTorch module).

    use_bf16=True runs both matmuls with bf16 operands / f32 accumulation
    (recommended on real v5e/v6e/v7x; ~1e-2 rel error vs f32 reference).
    """
    n, d_in = x.shape
    assert d_in == INPUT_DIM
    assert tile_n % 128 == 0 and tile_n >= 128, "tile_n must be a multiple of 128"

    if n == 0:  # empty-input guard (grid=(0,) is degenerate)
        return jnp.zeros((0, OUT_DIM), dtype=x.dtype)

    matmul_dtype = jnp.bfloat16 if use_bf16 else jnp.float32
    mm_itemsize = jnp.dtype(matmul_dtype).itemsize

    # Feature-major layout for the kernel (layout plumbing only).
    xt = x.T                                   # [3, N]
    w1t = w1.T                                 # [H, 3]
    w2t = w2.T                                 # [4, H]
    b1c = b1.reshape(HIDDEN_DIM, 1)
    b2c = b2.reshape(OUT_DIM, 1)

    # ---- Generation-aware tile selection ------------------------------------
    n128 = pl.cdiv(n, 128) * 128
    tile = min(tile_n, n128)

    capacity = _vmem_capacity_bytes()
    budget = int(0.75 * capacity)
    # Shrink the tile until its honest VMEM footprint fits the budget.
    while tile > 128 and _tile_vmem_bytes(tile, mm_itemsize) > budget:
        tile = max(128, ((tile // 2) // 128) * 128)

    # Prefer >= 2 grid steps so ("parallel",) can shard across v7x's 2 TCs.
    if n128 // tile < 2 and n128 >= 2 * 128:
        tile = min(tile, max(128, ((n128 // 2) // 128) * 128))

    n_padded = pl.cdiv(n, tile) * tile
    if n_padded != n:
        xt = jnp.pad(xt, ((0, 0), (0, n_padded - n)))
    grid = (n_padded // tile,)

    vmem_need = _tile_vmem_bytes(tile, mm_itemsize)
    vmem_limit = int(min(budget, max(32 * 1024 * 1024, 2 * vmem_need)))

    # Advisory cost estimate so XLA doesn't treat the custom call as free.
    weight_bytes = 4 * (INPUT_DIM * HIDDEN_DIM + HIDDEN_DIM
                        + HIDDEN_DIM * OUT_DIM + OUT_DIM)
    cost = pl.CostEstimate(
        flops=2 * n_padded * (INPUT_DIM * HIDDEN_DIM + HIDDEN_DIM * OUT_DIM),
        transcendentals=0,
        bytes_accessed=n_padded * 4 * (INPUT_DIM + OUT_DIM) + weight_bytes,
    )

    out_t = pl.pallas_call(
        functools.partial(coarse_mlp_kernel, matmul_dtype=matmul_dtype),
        out_shape=jax.ShapeDtypeStruct((OUT_DIM, n_padded), x.dtype),
        grid_spec=pltpu.PrefetchScalarGridSpec(
            num_scalar_prefetch=0,
            grid=grid,
            in_specs=[
                # streamed point tile (lane-dense over points)
                pl.BlockSpec((INPUT_DIM, tile), lambda i: (0, i)),
                # grid-invariant weights / biases (constant index_map)
                pl.BlockSpec((HIDDEN_DIM, INPUT_DIM), lambda i: (0, 0)),
                pl.BlockSpec((HIDDEN_DIM, 1), lambda i: (0, 0)),
                pl.BlockSpec((OUT_DIM, HIDDEN_DIM), lambda i: (0, 0)),
                pl.BlockSpec((OUT_DIM, 1), lambda i: (0, 0)),
            ],
            out_specs=pl.BlockSpec((OUT_DIM, tile), lambda i: (0, i)),
        ),
        compiler_params=pltpu.CompilerParams(
            dimension_semantics=("parallel",),   # megacore / v7x 2-TC sharding
            vmem_limit_bytes=vmem_limit,
        ),
        cost_estimate=cost,
    )(xt, w1t, b1c, w2t, b2c)

    # back to the caller's [N, 4] layout, dropping padding.
    # TODO(synk): if the surrounding pipeline can keep feature-major [3,N]/[4,N]
    # layouts, drop this transpose and the x.T above (two HBM-bound XLA ops).
    return out_t[:, :n].T


def init_params(key):
    """PyTorch nn.Linear default init (U[-1/sqrt(fan_in), 1/sqrt(fan_in)]).

    Weights stored as [in_features, out_features]."""
    k1, k2, k3, k4 = jax.random.split(key, 4)
    bound1 = 1.0 / jnp.sqrt(INPUT_DIM)
    bound2 = 1.0 / jnp.sqrt(HIDDEN_DIM)
    w1 = jax.random.uniform(k1, (INPUT_DIM, HIDDEN_DIM), jnp.float32, -bound1, bound1)
    b1 = jax.random.uniform(k2, (HIDDEN_DIM,), jnp.float32, -bound1, bound1)
    w2 = jax.random.uniform(k3, (HIDDEN_DIM, OUT_DIM), jnp.float32, -bound2, bound2)
    b2 = jax.random.uniform(k4, (OUT_DIM,), jnp.float32, -bound2, bound2)
    return w1, b1, w2, b2


if __name__ == "__main__":
    key = jax.random.PRNGKey(0)
    kx, kp = jax.random.split(key)

    # small batch of 3-D sample points; deliberately NOT a multiple of 128 to
    # exercise the cdiv / padding path.
    N = 200
    x = jax.random.normal(kx, (N, INPUT_DIM), dtype=jnp.float32)
    w1, b1, w2, b2 = init_params(kp)

    ref = jnp.maximum(x @ w1 + b1, 0.0) @ w2 + b2

    # default path: f32 operands / f32 accumulation (runs on HW and interpret).
    out = coarse_network_forward(x, w1, b1, w2, b2)
    out = jax.block_until_ready(out)
    assert out.shape == (N, OUT_DIM)
    assert jnp.allclose(out, ref, atol=1e-5, rtol=1e-5), "mismatch (f32 path)"

    # empty-input guard
    empty = coarse_network_forward(jnp.zeros((0, INPUT_DIM), jnp.float32),
                                   w1, b1, w2, b2)
    assert empty.shape == (0, OUT_DIM)

    print("KERNEL_OK")
</pallas_src>

<mosaic_0001>
module attributes {stable_mosaic.version = 11 : i64} {
  func.func @coarse_mlp_kernel(%arg0: i32, %arg1: memref<3x128xf32, #tpu.memory_space<vmem>>, %arg2: memref<256x3xf32, #tpu.memory_space<vmem>>, %arg3: memref<256x1xf32, #tpu.memory_space<vmem>>, %arg4: memref<4x256xf32, #tpu.memory_space<vmem>>, %arg5: memref<4x1xf32, #tpu.memory_space<vmem>>, %arg6: memref<4x128xf32, #tpu.memory_space<vmem>>) attributes {dimension_semantics = [#tpu.dimension_semantics<parallel>], iteration_bounds = array<i64: 2>, scalar_prefetch = 0 : i64, scratch_operands = 0 : i64, tpu.core_type = #tpu.core_type<tc>, window_params = [{transform_indices = @transform_0, window_bounds = array<i64: 3, 128>}, {pipeline_mode = #tpu.pipeline_mode<synchronous>, transform_indices = @transform_1, window_bounds = array<i64: 256, 3>}, {pipeline_mode = #tpu.pipeline_mode<synchronous>, transform_indices = @transform_2, window_bounds = array<i64: 256, 1>}, {pipeline_mode = #tpu.pipeline_mode<synchronous>, transform_indices = @transform_3, window_bounds = array<i64: 4, 256>}, {pipeline_mode = #tpu.pipeline_mode<synchronous>, transform_indices = @transform_4, window_bounds = array<i64: 4, 1>}, {transform_indices = @transform_5, window_bounds = array<i64: 4, 128>}]} {
    %c0 = arith.constant 0 : index
    %c0_0 = arith.constant 0 : index
    %0 = vector.load %arg1[%c0, %c0_0] : memref<3x128xf32, #tpu.memory_space<vmem>>, vector<3x128xf32>
    %c0_1 = arith.constant 0 : index
    %c0_2 = arith.constant 0 : index
    %1 = vector.load %arg2[%c0_1, %c0_2] : memref<256x3xf32, #tpu.memory_space<vmem>>, vector<256x3xf32>
    %cst = arith.constant dense<0.000000e+00> : vector<256x128xf32>
    %2 = tpu.matmul %1, %0, %cst {dimension_numbers = #tpu.dot_dimension_numbers<[1], [0], [0], [1], [0, 0, 1, 1], [], []>} : vector<256x3xf32>, vector<3x128xf32>, vector<256x128xf32> -> vector<256x128xf32>
    %c0_3 = arith.constant 0 : index
    %c0_4 = arith.constant 0 : index
    %3 = vector.load %arg3[%c0_3, %c0_4] : memref<256x1xf32, #tpu.memory_space<vmem>>, vector<256x1xf32>
    %4 = vector.broadcast %3 : vector<256x1xf32> to vector<256x128xf32>
    %5 = arith.addf %2, %4 : vector<256x128xf32>
    %cst_5 = arith.constant 0.000000e+00 : f32
    %6 = vector.broadcast %cst_5 : f32 to vector<256x128xf32>
    %7 = arith.maximumf %5, %6 : vector<256x128xf32>
    %c0_6 = arith.constant 0 : index
    %c0_7 = arith.constant 0 : index
    %8 = vector.load %arg4[%c0_6, %c0_7] : memref<4x256xf32, #tpu.memory_space<vmem>>, vector<4x256xf32>
    %cst_8 = arith.constant dense<0.000000e+00> : vector<4x128xf32>
    %9 = tpu.matmul %8, %7, %cst_8 {dimension_numbers = #tpu.dot_dimension_numbers<[1], [0], [0], [1], [0, 0, 1, 1], [], []>} : vector<4x256xf32>, vector<256x128xf32>, vector<4x128xf32> -> vector<4x128xf32>
    %c0_9 = arith.constant 0 : index
    %c0_10 = arith.constant 0 : index
    %10 = vector.load %arg5[%c0_9, %c0_10] : memref<4x1xf32, #tpu.memory_space<vmem>>, vector<4x1xf32>
    %11 = vector.broadcast %10 : vector<4x1xf32> to vector<4x128xf32>
    %12 = arith.addf %9, %11 : vector<4x128xf32>
    %c0_11 = arith.constant 0 : index
    %c0_12 = arith.constant 0 : index
    %13 = vector.load %arg6[%c0_11, %c0_12] : memref<4x128xf32, #tpu.memory_space<vmem>>, vector<4x128xf32>
    tpu.vector_store %arg6[%c0_11, %c0_12], %12 {strides = array<i32>} : memref<4x128xf32, #tpu.memory_space<vmem>>, vector<4x128xf32>,
    return
  }
  func.func @transform_0(%arg0: i32) -> (i32, i32) {
    %c0_i32 = arith.constant 0 : i32
    %c0_i32_0 = arith.constant 0 : i32
    return %c0_i32, %arg0 : i32, i32
  }
  func.func @transform_1(%arg0: i32) -> (i32, i32) {
    %c0_i32 = arith.constant 0 : i32
    %c0_i32_0 = arith.constant 0 : i32
    %c0_i32_1 = arith.constant 0 : i32
    return %c0_i32, %c0_i32_0 : i32, i32
  }
  func.func @transform_2(%arg0: i32) -> (i32, i32) {
    %c0_i32 = arith.constant 0 : i32
    %c0_i32_0 = arith.constant 0 : i32
    %c0_i32_1 = arith.constant 0 : i32
    return %c0_i32, %c0_i32_0 : i32, i32
  }
  func.func @transform_3(%arg0: i32) -> (i32, i32) {
    %c0_i32 = arith.constant 0 : i32
    %c0_i32_0 = arith.constant 0 : i32
    %c0_i32_1 = arith.constant 0 : i32
    return %c0_i32, %c0_i32_0 : i32, i32
  }
  func.func @transform_4(%arg0: i32) -> (i32, i32) {
    %c0_i32 = arith.constant 0 : i32
    %c0_i32_0 = arith.constant 0 : i32
    %c0_i32_1 = arith.constant 0 : i32
    return %c0_i32, %c0_i32_0 : i32, i32
  }
  func.func @transform_5(%arg0: i32) -> (i32, i32) {
    %c0_i32 = arith.constant 0 : i32
    %c0_i32_0 = arith.constant 0 : i32
    return %c0_i32, %arg0 : i32, i32
  }
}

</mosaic_0001>

<llo_original>
// kernel: coarse_network_forward.1
$region0: #{coarse_network_forward.1}
  #allocation0 [shape = 'u32[]', space=smem, size = 0x4, offset = 0x4, fixed_abs, tag = 'smem constant byte address 0x4 - core index']
  #allocation1 [shape = 'u32[72,128]{1,0:T(1,128)}', space=vmem, size = 0x9000, scoped, tag = 'internal scratch']
  %s0 = inlined_call_operand.vmem [shape: f32[3,256], index: 0, kind: input, shape index: {}]
  %s1 = inlined_call_operand.vmem [shape: f32[256,3], index: 1, kind: input, shape index: {}]
  %s2 = inlined_call_operand.vmem [shape: f32[256,1], index: 2, kind: input, shape index: {}]
  %s3 = inlined_call_operand.vmem [shape: f32[4,256], index: 3, kind: input, shape index: {}]
  %s4 = inlined_call_operand.vmem [shape: f32[4,1], index: 4, kind: input, shape index: {}]
  %s5 = inlined_call_operand.vmem [shape: f32[4,256], index: 5, kind: output, shape index: {}]
  %s6 = sld [smem:[#allocation0]]
  $region53: #{coarse_network_forward.1} parent=0
    _
  %s8 = ssub.s32 1, %s6
  %s9 = scalar_select 0, %s8, %s6
  loop: start=0, step=1, limit=4
  $region2: #{coarse_network_forward.1} parent=0 // loop_pre_header
    _
  $region3: #{coarse_network_forward.1} parent=0 // loop_header
    %s11 = sphi 0, %s15
    %p12 = scmp.ge.s32.totalorder %s11, 4
    %s21 = sphi 0, %s23
    %s24 = sphi 0, %s21
    %s25 = sphi 0, %s24
    %s41 = sphi 0, %s25
    %s45 = sphi 0, %s45
    %s47 = sphi 0, %s45
    %s48 = sphi 0, %s47
    %s62 = sphi 0, %s48
    %s66 = sphi 0, %s66
    %s68 = sphi 0, %s66
    %s69 = sphi 0, %s68
    %s83 = sphi 0, %s69
    %s87 = sphi 0, %s87
    %s89 = sphi 0, %s87
    %s90 = sphi 0, %s89
    %s104 = sphi 0, %s90
    %s108 = sphi 0, %s108
    %s110 = sphi 0, %s108
    %s111 = sphi 0, %s110
    %s125 = sphi 0, %s111
    %s131 = sphi 0, %s133
    %s134 = sphi 0, %s131
    %s135 = sphi 0, %s134
    %s151 = sphi 0, %s135
  $region4: #{coarse_network_forward.1} parent=0 // loop_header_branch
    %14 = sbr.rel (%p12) target = $region8
  $region5: #{coarse_network_forward.1} parent=0 // loop_body
    %s16 = ssub.s32 %s11, 1
    %s17 = ssub.s32 %s11, 2
    %s18 = sadd.s32 %s11, 1
    %s19 = ssub.s32 %s11, %s18
    %p20 = scmp.eq.s32.totalorder %s19, 0
    %s22 = sadd.s32 %s21, 1
    %s23 = scalar_select %p20, %s21, %s22
    %p26 = pneg %p20
    %p27 = scmp.eq.s32.totalorder %s11, 1
    %p28 = por %p26, %p27
    %p29 = scmp.ne.s32.totalorder %s21, %s24
    %p30 = scmp.eq.s32.totalorder %s11, 0
    %p31 = por %p29, %p30
    %p32 = scmp.ne.s32.totalorder %s21, %s24
    %p33 = scmp.eq.s32.totalorder %s16, 1
    %p34 = por %p32, %p33
    %p35 = scmp.ne.s32.totalorder %s24, %s25
    %p36 = scmp.eq.s32.totalorder %s16, 0
    %p37 = por %p35, %p36
    %p38 = scmp.ne.s32.totalorder %s24, %s25
    %p39 = scmp.eq.s32.totalorder %s17, 1
    %p40 = por %p38, %p39
    %p42 = scmp.ne.s32.totalorder %s25, %s41
    %p43 = scmp.eq.s32.totalorder %s17, 0
    %p44 = por %p42, %p43
    %s46 = sadd.s32 %s45, 1
    %p49 = scmp.eq.s32.totalorder %s11, 1
    %p50 = scmp.ne.s32.totalorder %s45, %s47
    %p51 = scmp.eq.s32.totalorder %s11, 0
    %p52 = por %p50, %p51
    %p53 = scmp.ne.s32.totalorder %s45, %s47
    %p54 = scmp.eq.s32.totalorder %s16, 1
    %p55 = por %p53, %p54
    %p56 = scmp.ne.s32.totalorder %s47, %s48
    %p57 = scmp.eq.s32.totalorder %s16, 0
    %p58 = por %p56, %p57
    %p59 = scmp.ne.s32.totalorder %s47, %s48
    %p60 = scmp.eq.s32.totalorder %s17, 1
    %p61 = por %p59, %p60
    %p63 = scmp.ne.s32.totalorder %s48, %s62
    %p64 = scmp.eq.s32.totalorder %s17, 0
    %p65 = por %p63, %p64
    %s67 = sadd.s32 %s66, 1
    %p70 = scmp.eq.s32.totalorder %s11, 1
    %p71 = scmp.ne.s32.totalorder %s66, %s68
    %p72 = scmp.eq.s32.totalorder %s11, 0
    %p73 = por %p71, %p72
    %p74 = scmp.ne.s32.totalorder %s66, %s68
    %p75 = scmp.eq.s32.totalorder %s16, 1
    %p76 = por %p74, %p75
    %p77 = scmp.ne.s32.totalorder %s68, %s69
    %p78 = scmp.eq.s32.totalorder %s16, 0
    %p79 = por %p77, %p78
    %p80 = scmp.ne.s32.totalorder %s68, %s69
    %p81 = scmp.eq.s32.totalorder %s17, 1
    %p82 = por %p80, %p81
    %p84 = scmp.ne.s32.totalorder %s69, %s83
    %p85 = scmp.eq.s32.totalorder %s17, 0
    %p86 = por %p84, %p85
    %s88 = sadd.s32 %s87, 1
    %p91 = scmp.eq.s32.totalorder %s11, 1
    %p92 = scmp.ne.s32.totalorder %s87, %s89
    %p93 = scmp.eq.s32.totalorder %s11, 0
    %p94 = por %p92, %p93
    %p95 = scmp.ne.s32.totalorder %s87, %s89
    %p96 = scmp.eq.s32.totalorder %s16, 1
    %p97 = por %p95, %p96
    %p98 = scmp.ne.s32.totalorder %s89, %s90
    %p99 = scmp.eq.s32.totalorder %s16, 0
    %p100 = por %p98, %p99
    %p101 = scmp.ne.s32.totalorder %s89, %s90
    %p102 = scmp.eq.s32.totalorder %s17, 1
    %p103 = por %p101, %p102
    %p105 = scmp.ne.s32.totalorder %s90, %s104
    %p106 = scmp.eq.s32.totalorder %s17, 0
    %p107 = por %p105, %p106
    %s109 = sadd.s32 %s108, 1
    %p112 = scmp.eq.s32.totalorder %s11, 1
    %p113 = scmp.ne.s32.totalorder %s108, %s110
    %p114 = scmp.eq.s32.totalorder %s11, 0
    %p115 = por %p113, %p114
    %p116 = scmp.ne.s32.totalorder %s108, %s110
    %p117 = scmp.eq.s32.totalorder %s16, 1
    %p118 = por %p116, %p117
    %p119 = scmp.ne.s32.totalorder %s110, %s111
    %p120 = scmp.eq.s32.totalorder %s16, 0
    %p121 = por %p119, %p120
    %p122 = scmp.ne.s32.totalorder %s110, %s111
    %p123 = scmp.eq.s32.totalorder %s17, 1
    %p124 = por %p122, %p123
    %p126 = scmp.ne.s32.totalorder %s111, %s125
    %p127 = scmp.eq.s32.totalorder %s17, 0
    %p128 = por %p126, %p127
    %s129 = ssub.s32 %s11, %s18
    %p130 = scmp.eq.s32.totalorder %s129, 0
    %s132 = sadd.s32 %s131, 1
    %s133 = scalar_select %p130, %s131, %s132
    %p136 = pneg %p130
    %p137 = scmp.eq.s32.totalorder %s11, 1
    %p138 = por %p136, %p137
    %p139 = scmp.ne.s32.totalorder %s131, %s134
    %p140 = scmp.eq.s32.totalorder %s11, 0
    %p141 = por %p139, %p140
    %p142 = scmp.ne.s32.totalorder %s131, %s134
    %p143 = scmp.eq.s32.totalorder %s16, 1
    %p144 = por %p142, %p143
    %p145 = scmp.ne.s32.totalorder %s134, %s135
    %p146 = scmp.eq.s32.totalorder %s16, 0
    %p147 = por %p145, %p146
    %p148 = scmp.ne.s32.totalorder %s134, %s135
    %p149 = scmp.eq.s32.totalorder %s17, 1
    %p150 = por %p148, %p149
    %p152 = scmp.ne.s32.totalorder %s135, %s151
    %p153 = scmp.eq.s32.totalorder %s17, 0
    %p154 = por %p152, %p153
    %p155 = scmp.le.s32.totalorder 1, %s11
    %p156 = scmp.lt.s32.totalorder %s11, 3
    %p157 = pnand %p155, %p156
    %p158 = pneg %p157
    // Predicated region
    $region9: #{coarse_network_forward.1} parent=5 // pred_check
      _
    $region10: #{coarse_network_forward.1} parent=5 // pred_check_branch
      %160 = sbr.rel (%p157) target = $region12
    $region11: #{coarse_network_forward.1} parent=5 // pred_region
      %s161 = ssub.s32 %s11, 1
      // Predicated region
      $region13: #{coarse_network_forward.1} parent=11 // pred_check
        %p162 = pneg %p58
      $region14: #{coarse_network_forward.1} parent=11 // pred_check_branch
        %164 = sbr.rel (%p162) target = $region16
      $region15: #{coarse_network_forward.1} parent=11 // pred_region
        _
      $region16: #{coarse_network_forward.1} parent=11 // pred_fallthru
        _
      // Predicated region
      $region17: #{coarse_network_forward.1} parent=11 // pred_check
        %p165 = pneg %p79
      $region18: #{coarse_network_forward.1} parent=11 // pred_check_branch
        %167 = sbr.rel (%p165) target = $region20
      $region19: #{coarse_network_forward.1} parent=11 // pred_region
        _
      $region20: #{coarse_network_forward.1} parent=11 // pred_fallthru
        _
      // Predicated region
      $region21: #{coarse_network_forward.1} parent=11 // pred_check
        %p168 = pneg %p100
      $region22: #{coarse_network_forward.1} parent=11 // pred_check_branch
        %170 = sbr.rel (%p168) target = $region24
      $region23: #{coarse_network_forward.1} parent=11 // pred_region
        _
      $region24: #{coarse_network_forward.1} parent=11 // pred_fallthru
        _
      // Predicated region
      $region25: #{coarse_network_forward.1} parent=11 // pred_check
        %p171 = pneg %p121
      $region26: #{coarse_network_forward.1} parent=11 // pred_check_branch
        %173 = sbr.rel (%p171) target = $region28
      $region27: #{coarse_network_forward.1} parent=11 // pred_region
        _
      $region28: #{coarse_network_forward.1} parent=11 // pred_fallthru
        _
    $region12: #{coarse_network_forward.1} parent=5 // pred_fallthru
      _
    %p174 = scmp.lt.s32.totalorder %s11, 2
    // Predicated region
    $region29: #{coarse_network_forward.1} parent=5 // pred_check
      %p175 = pneg %p174
    $region30: #{coarse_network_forward.1} parent=5 // pred_check_branch
      %177 = sbr.rel (%p175) target = $region32
    $region31: #{coarse_network_forward.1} parent=5 // pred_region
      // Predicated region
      $region33: #{coarse_network_forward.1} parent=31 // pred_check
        %p178 = pneg %p31
      $region34: #{coarse_network_forward.1} parent=31 // pred_check_branch
        %180 = sbr.rel (%p178) target = $region36
      $region35: #{coarse_network_forward.1} parent=31 // pred_region
        %p181 = scmp.lt.s32.totalorder %s11, 1
        %s182 = scalar_select %p181, %s11, 1
        %s183 = smul.addr %s182, 4
        %s184 = scalar_lea.vmem %s0, %s183
      $region36: #{coarse_network_forward.1} parent=31 // pred_fallthru
        _
    $region32: #{coarse_network_forward.1} parent=5 // pred_fallthru
      _
    %p185 = scmp.le.s32.totalorder 1, %s11
    %p186 = scmp.lt.s32.totalorder %s11, 3
    %p187 = pnand %p185, %p186
    %p188 = pneg %p187
    // Predicated region
    $region37: #{coarse_network_forward.1} parent=5 // pred_check
      _
    $region38: #{coarse_network_forward.1} parent=5 // pred_check_branch
      %190 = sbr.rel (%p187) target = $region40
    $region39: #{coarse_network_forward.1} parent=5 // pred_region
      %s191 = ssub.s32 %s11, 1
      %p192 = scmp.lt.s32.totalorder %s16, 1
      %s193 = scalar_select %p192, %s16, 1
      %s194 = smul.addr %s193, 4
      %s195 = scalar_lea.vmem %s0, %s194
      %p196 = pneg %p37
      %p197 = pneg %p34
      %p198 = pneg %p58
      %p199 = pneg %p55
      %p200 = pneg %p79
      %p201 = pneg %p76
      %p202 = pneg %p100
      %p203 = pneg %p97
      %p204 = pneg %p121
      %p205 = pneg %p118
      %p206 = pneg %p147
      %p207 = pneg %p144
      %p208 = scmp.lt.s32.totalorder %s16, 1
      %s209 = scalar_select %p208, %s16, 1
      %s210 = smul.addr %s209, 4
      %s211 = scalar_lea.vmem %s5, %s210
      %p212 = scmp.lt.s32.totalorder %s16, 1
      %s213 = scalar_select %p212, %s16, 1
      %s214 = smul.addr %s213, 4
      %s215 = scalar_lea.vmem %s0, %s214
      %p216 = scmp.lt.s32.totalorder %s16, 1
      %s217 = scalar_select %p216, %s16, 1
      %s218 = smul.addr %s217, 4
      %s219 = scalar_lea.vmem %s5, %s218
      %v220 = vld [vmem:[%s215] sm:$0x7]
      %v221 = vld [vmem:[%s1] sm:$0xff]
      %v222 = vld [vmem:[%s1 + $0x8] sm:$0xff]
      %v223 = vld [vmem:[%s1 + $0x10] sm:$0xff]
      %v224 = vld [vmem:[%s1 + $0x18] sm:$0xff]
      %v225 = vld [vmem:[%s1 + $0x20] sm:$0xff]
      %v226 = vld [vmem:[%s1 + $0x28] sm:$0xff]
      %v227 = vld [vmem:[%s1 + $0x30] sm:$0xff]
      %v228 = vld [vmem:[%s1 + $0x38] sm:$0xff]
      %v229 = vld [vmem:[%s1 + $0x40] sm:$0xff]
      %v230 = vld [vmem:[%s1 + $0x48] sm:$0xff]
      %v231 = vld [vmem:[%s1 + $0x50] sm:$0xff]
      %v232 = vld [vmem:[%s1 + $0x58] sm:$0xff]
      %v233 = vld [vmem:[%s1 + $0x60] sm:$0xff]
      %v234 = vld [vmem:[%s1 + $0x68] sm:$0xff]
      %v235 = vld [vmem:[%s1 + $0x70] sm:$0xff]
      %v236 = vld [vmem:[%s1 + $0x78] sm:$0xff]
      %v237 = vld [vmem:[%s1 + $0x80] sm:$0xff]
      %v238 = vld [vmem:[%s1 + $0x88] sm:$0xff]
      %v239 = vld [vmem:[%s1 + $0x90] sm:$0xff]
      %v240 = vld [vmem:[%s1 + $0x98] sm:$0xff]
      %v241 = vld [vmem:[%s1 + $0xa0] sm:$0xff]
      %v242 = vld [vmem:[%s1 + $0xa8] sm:$0xff]
      %v243 = vld [vmem:[%s1 + $0xb0] sm:$0xff]
      %v244 = vld [vmem:[%s1 + $0xb8] sm:$0xff]
      %v245 = vld [vmem:[%s1 + $0xc0] sm:$0xff]
      %v246 = vld [vmem:[%s1 + $0xc8] sm:$0xff]
      %v247 = vld [vmem:[%s1 + $0xd0] sm:$0xff]
      %v248 = vld [vmem:[%s1 + $0xd8] sm:$0xff]
      %v249 = vld [vmem:[%s1 + $0xe0] sm:$0xff]
      %v250 = vld [vmem:[%s1 + $0xe8] sm:$0xff]
      %v251 = vld [vmem:[%s1 + $0xf0] sm:$0xff]
      %v252 = vld [vmem:[%s1 + $0xf8] sm:$0xff]
      %v253 = vld [vmem:[%s2] sm:$0xff]
      %v254 = vld [vmem:[%s2 + $0x8] sm:$0xff]
      %v255 = vld [vmem:[%s2 + $0x10] sm:$0xff]
      %v256 = vld [vmem:[%s2 + $0x18] sm:$0xff]
      %v257 = vld [vmem:[%s2 + $0x20] sm:$0xff]
      %v258 = vld [vmem:[%s2 + $0x28] sm:$0xff]
      %v259 = vld [vmem:[%s2 + $0x30] sm:$0xff]
      %v260 = vld [vmem:[%s2 + $0x38] sm:$0xff]
      %v261 = vld [vmem:[%s2 + $0x40] sm:$0xff]
      %v262 = vld [vmem:[%s2 + $0x48] sm:$0xff]
      %v263 = vld [vmem:[%s2 + $0x50] sm:$0xff]
      %v264 = vld [vmem:[%s2 + $0x58] sm:$0xff]
      %v265 = vld [vmem:[%s2 + $0x60] sm:$0xff]
      %v266 = vld [vmem:[%s2 + $0x68] sm:$0xff]
      %v267 = vld [vmem:[%s2 + $0x70] sm:$0xff]
      %v268 = vld [vmem:[%s2 + $0x78] sm:$0xff]
      %v269 = vld [vmem:[%s2 + $0x80] sm:$0xff]
      %v270 = vld [vmem:[%s2 + $0x88] sm:$0xff]
      %v271 = vld [vmem:[%s2 + $0x90] sm:$0xff]
      %v272 = vld [vmem:[%s2 + $0x98] sm:$0xff]
      %v273 = vld [vmem:[%s2 + $0xa0] sm:$0xff]
      %v274 = vld [vmem:[%s2 + $0xa8] sm:$0xff]
      %v275 = vld [vmem:[%s2 + $0xb0] sm:$0xff]
      %v276 = vld [vmem:[%s2 + $0xb8] sm:$0xff]
      %v277 = vld [vmem:[%s2 + $0xc0] sm:$0xff]
      %v278 = vld [vmem:[%s2 + $0xc8] sm:$0xff]
      %v279 = vld [vmem:[%s2 + $0xd0] sm:$0xff]
      %v280 = vld [vmem:[%s2 + $0xd8] sm:$0xff]
      %v281 = vld [vmem:[%s2 + $0xe0] sm:$0xff]
      %v282 = vld [vmem:[%s2 + $0xe8] sm:$0xff]
      %v283 = vld [vmem:[%s2 + $0xf0] sm:$0xff]
      %v284 = vld [vmem:[%s2 + $0xf8] sm:$0xff]
      %286 = vset.pattern.permute.xlu0 0
      %287 = vperm.xlu0 %286, %v253
      %v288 = vpop.permute.xlu0 %287
      %291 = vset.pattern.permute.xlu0 0
      %292 = vperm.xlu0 %291, %v254
      %v293 = vpop.permute.xlu0 %292
      %296 = vset.pattern.permute.xlu0 0
      %297 = vperm.xlu0 %296, %v255
      %v298 = vpop.permute.xlu0 %297
      %301 = vset.pattern.permute.xlu0 0
      %302 = vperm.xlu0 %301, %v256
      %v303 = vpop.permute.xlu0 %302
      %306 = vset.pattern.permute.xlu0 0
      %307 = vperm.xlu0 %306, %v257
      %v308 = vpop.permute.xlu0 %307
      %311 = vset.pattern.permute.xlu0 0
      %312 = vperm.xlu0 %311, %v258
      %v313 = vpop.permute.xlu0 %312
      %316 = vset.pattern.permute.xlu0 0
      %317 = vperm.xlu0 %316, %v259
      %v318 = vpop.permute.xlu0 %317
      %321 = vset.pattern.permute.xlu0 0
      %322 = vperm.xlu0 %321, %v260
      %v323 = vpop.permute.xlu0 %322
      %326 = vset.pattern.permute.xlu0 0
      %327 = vperm.xlu0 %326, %v261
      %v328 = vpop.permute.xlu0 %327
      %331 = vset.pattern.permute.xlu0 0
      %332 = vperm.xlu0 %331, %v262
      %v333 = vpop.permute.xlu0 %332
      %336 = vset.pattern.permute.xlu0 0
      %337 = vperm.xlu0 %336, %v263
      %v338 = vpop.permute.xlu0 %337
      %341 = vset.pattern.permute.xlu0 0
      %342 = vperm.xlu0 %341, %v264
      %v343 = vpop.permute.xlu0 %342
      %346 = vset.pattern.permute.xlu0 0
      %347 = vperm.xlu0 %346, %v265
      %v348 = vpop.permute.xlu0 %347
      %351 = vset.pattern.permute.xlu0 0
      %352 = vperm.xlu0 %351, %v266
      %v353 = vpop.permute.xlu0 %352
      %356 = vset.pattern.permute.xlu0 0
      %357 = vperm.xlu0 %356, %v267
      %v358 = vpop.permute.xlu0 %357
      %361 = vset.pattern.permute.xlu0 0
      %362 = vperm.xlu0 %361, %v268
      %v363 = vpop.permute.xlu0 %362
      %366 = vset.pattern.permute.xlu0 0
      %367 = vperm.xlu0 %366, %v269
      %v368 = vpop.permute.xlu0 %367
      %371 = vset.pattern.permute.xlu0 0
      %372 = vperm.xlu0 %371, %v270
      %v373 = vpop.permute.xlu0 %372
      %376 = vset.pattern.permute.xlu0 0
      %377 = vperm.xlu0 %376, %v271
      %v378 = vpop.permute.xlu0 %377
      %381 = vset.pattern.permute.xlu0 0
      %382 = vperm.xlu0 %381, %v272
      %v383 = vpop.permute.xlu0 %382
      %386 = vset.pattern.permute.xlu0 0
      %387 = vperm.xlu0 %386, %v273
      %v388 = vpop.permute.xlu0 %387
      %391 = vset.pattern.permute.xlu0 0
      %392 = vperm.xlu0 %391, %v274
      %v393 = vpop.permute.xlu0 %392
      %396 = vset.pattern.permute.xlu0 0
      %397 = vperm.xlu0 %396, %v275
      %v398 = vpop.permute.xlu0 %397
      %401 = vset.pattern.permute.xlu0 0
      %402 = vperm.xlu0 %401, %v276
      %v403 = vpop.permute.xlu0 %402
      %406 = vset.pattern.permute.xlu0 0
      %407 = vperm.xlu0 %406, %v277
      %v408 = vpop.permute.xlu0 %407
      %411 = vset.pattern.permute.xlu0 0
      %412 = vperm.xlu0 %411, %v278
      %v413 = vpop.permute.xlu0 %412
      %416 = vset.pattern.permute.xlu0 0
      %417 = vperm.xlu0 %416, %v279
      %v418 = vpop.permute.xlu0 %417
      %421 = vset.pattern.permute.xlu0 0
      %422 = vperm.xlu0 %421, %v280
      %v423 = vpop.permute.xlu0 %422
      %426 = vset.pattern.permute.xlu0 0
      %427 = vperm.xlu0 %426, %v281
      %v428 = vpop.permute.xlu0 %427
      %431 = vset.pattern.permute.xlu0 0
      %432 = vperm.xlu0 %431, %v282
      %v433 = vpop.permute.xlu0 %432
      %436 = vset.pattern.permute.xlu0 0
      %437 = vperm.xlu0 %436, %v283
      %v438 = vpop.permute.xlu0 %437
      %441 = vset.pattern.permute.xlu0 0
      %442 = vperm.xlu0 %441, %v284
      %v443 = vpop.permute.xlu0 %442
      %vm445 = vcmask 23552
      %v447 = vsel %vm445, %v221, 0
      %v450 = vsel %vm445, %v222, 0
      %v453 = vsel %vm445, %v223, 0
      %v456 = vsel %vm445, %v224, 0
      %v459 = vsel %vm445, %v225, 0
      %v462 = vsel %vm445, %v226, 0
      %v465 = vsel %vm445, %v227, 0
      %v468 = vsel %vm445, %v228, 0
      %v471 = vsel %vm445, %v229, 0
      %v474 = vsel %vm445, %v230, 0
      %v477 = vsel %vm445, %v231, 0
      %v480 = vsel %vm445, %v232, 0
      %v483 = vsel %vm445, %v233, 0
      %v486 = vsel %vm445, %v234, 0
      %v489 = vsel %vm445, %v235, 0
      %v492 = vsel %vm445, %v236, 0
      %v495 = vsel %vm445, %v237, 0
      %v498 = vsel %vm445, %v238, 0
      %v501 = vsel %vm445, %v239, 0
      %v504 = vsel %vm445, %v240, 0
      %v507 = vsel %vm445, %v241, 0
      %v510 = vsel %vm445, %v242, 0
      %v513 = vsel %vm445, %v243, 0
      %v516 = vsel %vm445, %v244, 0
      %v519 = vsel %vm445, %v245, 0
      %v522 = vsel %vm445, %v246, 0
      %v525 = vsel %vm445, %v247, 0
      %v528 = vsel %vm445, %v248, 0
      %v531 = vsel %vm445, %v249, 0
      %v534 = vsel %vm445, %v250, 0
      %v537 = vsel %vm445, %v251, 0
      %v540 = vsel %vm445, %v252, 0
      %vm542 = vcmask 1042432
      %v544 = vsel %vm542, %v220, 0
      %546 = vmatpush.msra.mxu0 0.0
      %547 = vmatpush.msra.mxu0 0.0
      %548 = vmatpush.msra.mxu0 0.0
      %549 = vmatpush.msra.mxu0 0.0
      %550 = vmatpush.msra.mxu0 0.0
      %551 = vmatpush.msra.mxu0 0.0
      %552 = vmatpush.msra.mxu0 0.0
      %553 = vmatpush.msra.mxu0 0.0
      %554 = vmatpush.msra.mxu0 0.0
      %555 = vmatpush.msra.mxu0 0.0
      %556 = vmatpush.msra.mxu0 0.0
      %557 = vmatpush.msra.mxu0 0.0
      %558 = vmatpush.msra.mxu0 0.0
      %559 = vmatpush.msra.mxu0 0.0
      %560 = vmatpush.msra.mxu0 0.0
      %561 = vmatpush.msra.mxu0 %v544
      %562 = vmatmul.f32.gmra.mxu0 %v447
      %v563 = vpop.f32.mrf.mxu0
      %v564 = vadd.f32 %v288, %v563
      %565 = vmatmul.f32.gmra.mxu0 %v450
      %v566 = vpop.f32.mrf.mxu0
      %v567 = vadd.f32 %v293, %v566
      %568 = vmatmul.f32.gmra.mxu0 %v453
      %v569 = vpop.f32.mrf.mxu0
      %v570 = vadd.f32 %v298, %v569
      %571 = vmatmul.f32.gmra.mxu0 %v456
      %v572 = vpop.f32.mrf.mxu0
      %v573 = vadd.f32 %v303, %v572
      %574 = vmatmul.f32.gmra.mxu0 %v459
      %v575 = vpop.f32.mrf.mxu0
      %v576 = vadd.f32 %v308, %v575
      %577 = vmatmul.f32.gmra.mxu0 %v462
      %v578 = vpop.f32.mrf.mxu0
      %v579 = vadd.f32 %v313, %v578
      %580 = vmatmul.f32.gmra.mxu0 %v465
      %v581 = vpop.f32.mrf.mxu0
      %v582 = vadd.f32 %v318, %v581
      %583 = vmatmul.f32.gmra.mxu0 %v468
      %v584 = vpop.f32.mrf.mxu0
      %v585 = vadd.f32 %v323, %v584
      %586 = vmatmul.f32.gmra.mxu0 %v471
      %v587 = vpop.f32.mrf.mxu0
      %v588 = vadd.f32 %v328, %v587
      %589 = vmatmul.f32.gmra.mxu0 %v474
      %v590 = vpop.f32.mrf.mxu0
      %v591 = vadd.f32 %v333, %v590
      %592 = vmatmul.f32.gmra.mxu0 %v477
      %v593 = vpop.f32.mrf.mxu0
      %v594 = vadd.f32 %v338, %v593
      %595 = vmatmul.f32.gmra.mxu0 %v480
      %v596 = vpop.f32.mrf.mxu0
      %v597 = vadd.f32 %v343, %v596
      %598 = vmatmul.f32.gmra.mxu0 %v483
      %v599 = vpop.f32.mrf.mxu0
      %v600 = vadd.f32 %v348, %v599
      %601 = vmatmul.f32.gmra.mxu0 %v486
      %v602 = vpop.f32.mrf.mxu0
      %v603 = vadd.f32 %v353, %v602
      %604 = vmatmul.f32.gmra.mxu0 %v489
      %v605 = vpop.f32.mrf.mxu0
      %v606 = vadd.f32 %v358, %v605
      %607 = vmatmul.f32.gmra.mxu0 %v492
      %v608 = vpop.f32.mrf.mxu0
      %v609 = vadd.f32 %v363, %v608
      %610 = vmatmul.f32.gmra.mxu0 %v495
      %v611 = vpop.f32.mrf.mxu0
      %v612 = vadd.f32 %v368, %v611
      %613 = vmatmul.f32.gmra.mxu0 %v498
      %v614 = vpop.f32.mrf.mxu0
      %v615 = vadd.f32 %v373, %v614
      %616 = vmatmul.f32.gmra.mxu0 %v501
      %v617 = vpop.f32.mrf.mxu0
      %v618 = vadd.f32 %v378, %v617
      %619 = vmatmul.f32.gmra.mxu0 %v504
      %v620 = vpop.f32.mrf.mxu0
      %v621 = vadd.f32 %v383, %v620
      %622 = vmatmul.f32.gmra.mxu0 %v507
      %v623 = vpop.f32.mrf.mxu0
      %v624 = vadd.f32 %v388, %v623
      %625 = vmatmul.f32.gmra.mxu0 %v510
      %v626 = vpop.f32.mrf.mxu0
      %v627 = vadd.f32 %v393, %v626
      %628 = vmatmul.f32.gmra.mxu0 %v513
      %v629 = vpop.f32.mrf.mxu0
      %v630 = vadd.f32 %v398, %v629
      %631 = vmatmul.f32.gmra.mxu0 %v516
      %v632 = vpop.f32.mrf.mxu0
      %v633 = vadd.f32 %v403, %v632
      %634 = vmatmul.f32.gmra.mxu0 %v519
      %v635 = vpop.f32.mrf.mxu0
      %v636 = vadd.f32 %v408, %v635
      %637 = vmatmul.f32.gmra.mxu0 %v522
      %v638 = vpop.f32.mrf.mxu0
      %v639 = vadd.f32 %v413, %v638
      %640 = vmatmul.f32.gmra.mxu0 %v525
      %v641 = vpop.f32.mrf.mxu0
      %v642 = vadd.f32 %v418, %v641
      %643 = vmatmul.f32.gmra.mxu0 %v528
      %v644 = vpop.f32.mrf.mxu0
      %v645 = vadd.f32 %v423, %v644
      %646 = vmatmul.f32.gmra.mxu0 %v531
      %v647 = vpop.f32.mrf.mxu0
      %v648 = vadd.f32 %v428, %v647
      %649 = vmatmul.f32.gmra.mxu0 %v534
      %v650 = vpop.f32.mrf.mxu0
      %v651 = vadd.f32 %v433, %v650
      %652 = vmatmul.f32.gmra.mxu0 %v537
      %v653 = vpop.f32.mrf.mxu0
      %v654 = vadd.f32 %v438, %v653
      %655 = vmatmul.f32.gmra.mxu0 %v540
      %v656 = vpop.f32.mrf.mxu0
      %v657 = vadd.f32 %v443, %v656
      %658 = vdwg.mxu0
      %v659 = vmax.f32 %v564, 0.0
      %v660 = vmax.f32 %v567, 0.0
      %v661 = vmax.f32 %v570, 0.0
      %v662 = vmax.f32 %v573, 0.0
      %v663 = vmax.f32 %v576, 0.0
      %v664 = vmax.f32 %v579, 0.0
      %v665 = vmax.f32 %v582, 0.0
      %v666 = vmax.f32 %v585, 0.0
      %v667 = vmax.f32 %v588, 0.0
      %v668 = vmax.f32 %v591, 0.0
      %v669 = vmax.f32 %v594, 0.0
      %v670 = vmax.f32 %v597, 0.0
      %v671 = vmax.f32 %v600, 0.0
      %v672 = vmax.f32 %v603, 0.0
      %v673 = vmax.f32 %v606, 0.0
      %v674 = vmax.f32 %v609, 0.0
      %v675 = vmax.f32 %v612, 0.0
      %v676 = vmax.f32 %v615, 0.0
      %v677 = vmax.f32 %v618, 0.0
      %v678 = vmax.f32 %v621, 0.0
      %v679 = vmax.f32 %v624, 0.0
      %v680 = vmax.f32 %v627, 0.0
      %v681 = vmax.f32 %v630, 0.0
      %v682 = vmax.f32 %v633, 0.0
      %v683 = vmax.f32 %v636, 0.0
      %v684 = vmax.f32 %v639, 0.0
      %v685 = vmax.f32 %v642, 0.0
      %v686 = vmax.f32 %v645, 0.0
      %v687 = vmax.f32 %v648, 0.0
      %v688 = vmax.f32 %v651, 0.0
      %v689 = vmax.f32 %v654, 0.0
      %v690 = vmax.f32 %v657, 0.0
      %v691 = vld [vmem:[%s3] sm:$0xff]
      %v692 = vld [vmem:[%s4] sm:$0xf]
      %694 = vset.pattern.permute.xlu0 0
      %695 = vperm.xlu0 %694, %v692
      %v696 = vpop.permute.xlu0 %695
      %699 = vst [vmem:[#allocation1] ss:$2 sm:$0xff] %v691
      %v700 = vld.sshfl [vmem:[#allocation1] sm:$0xff pattern:$0x75316420]
      %v701 = vld.sshfl [vmem:[#allocation1 + $0x8] sm:$0xff pattern:$0x75316420]
      %704 = vmatpush.msra.mxu0 %v674
      %705 = vmatpush.msra.mxu0 %v673
      %706 = vmatpush.msra.mxu0 %v672
      %707 = vmatpush.msra.mxu0 %v671
      %708 = vmatpush.msra.mxu0 %v670
      %709 = vmatpush.msra.mxu0 %v669
      %710 = vmatpush.msra.mxu0 %v668
      %711 = vmatpush.msra.mxu0 %v667
      %712 = vmatpush.msra.mxu0 %v666
      %713 = vmatpush.msra.mxu0 %v665
      %714 = vmatpush.msra.mxu0 %v664
      %715 = vmatpush.msra.mxu0 %v663
      %716 = vmatpush.msra.mxu0 %v662
      %717 = vmatpush.msra.mxu0 %v661
      %718 = vmatpush.msra.mxu0 %v660
      %719 = vmatpush.msra.mxu0 %v659
      %720 = vmatmul.f32.gmra.mxu0 %v700
      %v721 = vpop.f32.mrf.mxu0
      %v722 = vadd.f32 %v696, %v721
      %723 = vdwg.mxu0
      %724 = vmatpush.msra.mxu0 %v690
      %725 = vmatpush.msra.mxu0 %v689
      %726 = vmatpush.msra.mxu0 %v688
      %727 = vmatpush.msra.mxu0 %v687
      %728 = vmatpush.msra.mxu0 %v686
      %729 = vmatpush.msra.mxu0 %v685
      %730 = vmatpush.msra.mxu0 %v684
      %731 = vmatpush.msra.mxu0 %v683
      %732 = vmatpush.msra.mxu0 %v682
      %733 = vmatpush.msra.mxu0 %v681
      %734 = vmatpush.msra.mxu0 %v680
      %735 = vmatpush.msra.mxu0 %v679
      %736 = vmatpush.msra.mxu0 %v678
      %737 = vmatpush.msra.mxu0 %v677
      %738 = vmatpush.msra.mxu0 %v676
      %739 = vmatpush.msra.mxu0 %v675
      %740 = vmatmul.f32.gmra.mxu0 %v701
      %v741 = vpop.f32.mrf.mxu0
      %v742 = vadd.f32 %v722, %v741
      %743 = vdwg.mxu0
      %744 = vst [vmem:[%s219] sm:$0xf] %v742
      %p745 = scmp.lt.s32.totalorder %s16, 1
      %s746 = scalar_select %p745, %s16, 1
      %s747 = smul.addr %s746, 4
      %s748 = scalar_lea.vmem %s5, %s747
      // Predicated region
      $region41: #{coarse_network_forward.1} parent=39 // pred_check
        %p749 = pneg %p144
      $region42: #{coarse_network_forward.1} parent=39 // pred_check_branch
        %751 = sbr.rel (%p749) target = $region44
      $region43: #{coarse_network_forward.1} parent=39 // pred_region
        _
      $region44: #{coarse_network_forward.1} parent=39 // pred_fallthru
        _
    $region40: #{coarse_network_forward.1} parent=5 // pred_fallthru
      _
    %p752 = scmp.le.s32.totalorder 2, %s11
    // Predicated region
    $region45: #{coarse_network_forward.1} parent=5 // pred_check
      %p753 = pneg %p752
    $region46: #{coarse_network_forward.1} parent=5 // pred_check_branch
      %755 = sbr.rel (%p753) target = $region48
    $region47: #{coarse_network_forward.1} parent=5 // pred_region
      %s756 = ssub.s32 %s11, 2
      // Predicated region
      $region49: #{coarse_network_forward.1} parent=47 // pred_check
        %p757 = pneg %p150
      $region50: #{coarse_network_forward.1} parent=47 // pred_check_branch
        %759 = sbr.rel (%p757) target = $region52
      $region51: #{coarse_network_forward.1} parent=47 // pred_region
        %p760 = scmp.lt.s32.totalorder %s17, 1
        %s761 = scalar_select %p760, %s17, 1
        %s762 = smul.addr %s761, 4
        %s763 = scalar_lea.vmem %s5, %s762
      $region52: #{coarse_network_forward.1} parent=47 // pred_fallthru
        _
    $region48: #{coarse_network_forward.1} parent=5 // pred_fallthru
      _
  $region6: #{coarse_network_forward.1} parent=0 // loop_footer
    %s15 = sadd.s32 1, %s11
  $region7: #{coarse_network_forward.1} parent=0 // loop_footer_branch
    %10 = sbr.rel target = $region3
  $region8: #{coarse_network_forward.1} parent=0 // loop_exit
    _

</llo_original>
